<compile_context>
chip_gen: v5e
topology: v5e:2x2
jax: 0.10.0
libtpu: 0.0.40
codegen_flags: <defaults>
</compile_context>

<pallas_src>
import jax
import jax.numpy as jnp
from jax.experimental import pallas as pl
from jax.experimental.pallas import tpu as pltpu


HIDDEN = 768          # XLM-RoBERTa base hidden size (fixed by nn.Linear(768, num_classes))
NUM_CLASSES = 9       # e.g. CoNLL-style NER tag set
LANE = 128            # TPU lane width
SUBLANE = 16          # row granule (bf16 sublane packing; also valid for f32 tiles)


def _round_up(x, m):
    return (x + m - 1) // m * m


def _linear_head_kernel(h_ref, w_ref, b_ref, o_ref):
    """o = h @ w + b for one tile of rows.

    h_ref: (tm, H)      hidden-state rows (bf16 or f32; cast to bf16 in-kernel)
    w_ref: (H, C_pad)   bf16 weight, classes axis lane-padded to 128 (VMEM-resident)
    b_ref: (1, C_pad)   f32 bias, lane-padded (VMEM-resident)
    o_ref: (tm, C_pad)  f32 logits tile (lane-dense stores)
    """
    h = h_ref[...].astype(jnp.bfloat16)   # no-op if the encoder already emitted bf16
    o_ref[...] = jnp.dot(h, w_ref[...], preferred_element_type=jnp.float32) + b_ref[...]


@jax.jit
def linear_entity_head(hidden_states, weight, bias):
    """Pallas implementation of `self.l1(roberta_output)`.

    hidden_states: [B, S, 768] bf16 (or f32) encoder output
    weight:        [num_classes, 768] f32 (PyTorch nn.Linear layout)
    bias:          [num_classes]      f32
    returns logits [B, S, C_pad] f32 with the classes axis lane-padded to 128; the caller
    narrows to [..., :num_classes] (or consumes the padded buffer directly).
    """
    B, S, H = hidden_states.shape
    C = weight.shape[0]
    M = B * S
    C_pad = _round_up(C, LANE)

    # Row tile: >=512 rows is already ~85% of HBM roofline; cap at 1024 so even f32 hidden tiles
    # double-buffer comfortably under v5e's 16 MiB scoped-VMEM default; aim for >=4 grid steps on
    # large inputs so the "parallel" row axis shards across v7x's two TensorCores.
    tm = max(SUBLANE, min(1024, _round_up(pl.cdiv(M, 4), SUBLANE)))
    grid = (pl.cdiv(M, tm),)          # ragged last block: Pallas masks the OOB writeback

    h2d = hidden_states.reshape(M, H)  # no dtype cast / no row pad here (no extra HBM pass)

    # Weight transposed to (H, C) so classes map to the lane axis; zero-pad classes to 128.
    w_t = jnp.pad(weight.T.astype(jnp.bfloat16), ((0, 0), (0, C_pad - C)))
    b2d = jnp.pad(bias.astype(jnp.float32), (0, C_pad - C)).reshape(1, C_pad)

    bytes_accessed = (M * H * h2d.dtype.itemsize   # hidden reads (bf16 or f32)
                      + H * C_pad * 2              # bf16 weight (resident, read once)
                      + C_pad * 4                  # f32 bias
                      + M * C_pad * 4)             # f32 logits writes
    cost = pl.CostEstimate(
        flops=2 * M * H * C_pad,
        transcendentals=0,
        bytes_accessed=bytes_accessed,
    )

    logits_pad = pl.pallas_call(
        _linear_head_kernel,
        out_shape=jax.ShapeDtypeStruct((M, C_pad), jnp.float32),
        grid_spec=pltpu.PrefetchScalarGridSpec(
            num_scalar_prefetch=0,
            grid=grid,
            in_specs=[
                pl.BlockSpec((tm, H), lambda i: (i, 0)),      # hidden rows tile (pipelined)
                pl.BlockSpec((H, C_pad), lambda i: (0, 0)),   # full weight, VMEM-resident
                pl.BlockSpec((1, C_pad), lambda i: (0, 0)),   # bias, VMEM-resident
            ],
            out_specs=pl.BlockSpec((tm, C_pad), lambda i: (i, 0)),  # lane-dense output
        ),
        compiler_params=pltpu.CompilerParams(
            dimension_semantics=("parallel",),   # row axis shards across v7x's 2 TensorCores
        ),
        cost_estimate=cost,
    )(h2d, w_t, b2d)

    return logits_pad.reshape(B, S, C_pad)


def frozen_xlm_roberta_stub(params, input_ids, attention_mask=None):
    """Deterministic stand-in for the frozen XLM-RoBERTa encoder (plain JAX glue).

    Emits bf16 hidden states [B, S, 768] directly (frozen pretrained encoder in inference
    precision), so the head kernel reads the dominant tensor at half the bandwidth.
    The attention_mask is consumed internally by the real encoder's attention; the embedding
    stub has no cross-token interaction, so it is unused here.
    """
    del attention_mask
    emb = params["embedding"]                      # [vocab, 768] bf16 (frozen)
    return jnp.take(emb, input_ids, axis=0)        # [B, S, 768] bf16


def xlm_roberta_linear_entity_tagger_forward(params, input_ids, attention_mask):
    """Full module forward: frozen encoder (stub) -> Pallas linear head -> narrow to num_classes."""
    hidden = frozen_xlm_roberta_stub(params, input_ids, attention_mask)
    logits_pad = linear_entity_head(hidden, params["l1_weight"], params["l1_bias"])
    # Narrow the lane-padded classes axis to match the PyTorch forward contract.  Downstream
    # consumers that can handle the 128-wide buffer (e.g. the loss) should skip this narrow.
    num_classes = params["l1_weight"].shape[0]
    return logits_pad[..., :num_classes]


def init_params(key, vocab_size=64, num_classes=NUM_CLASSES, hidden=HIDDEN):
    k_emb, k_w, k_b = jax.random.split(key, 3)
    # nn.Linear default init: U(-1/sqrt(fan_in), 1/sqrt(fan_in)), fan_in = 768
    bound = 1.0 / jnp.sqrt(jnp.asarray(hidden, jnp.float32))
    return {
        # Frozen encoder weights stored in bf16 (inference precision for the pretrained submodule).
        "embedding": (jax.random.normal(k_emb, (vocab_size, hidden), jnp.float32) * 0.02
                      ).astype(jnp.bfloat16),
        "l1_weight": jax.random.uniform(k_w, (num_classes, hidden), jnp.float32, -bound, bound),
        "l1_bias": jax.random.uniform(k_b, (num_classes,), jnp.float32, -bound, bound),
    }


if __name__ == "__main__":
    key = jax.random.PRNGKey(0)
    k_params, k_ids = jax.random.split(key)

    B, S = 2, 8
    vocab_size = 64

    params = init_params(k_params, vocab_size=vocab_size)
    input_ids = jax.random.randint(k_ids, (B, S), 0, vocab_size, dtype=jnp.int32)
    attention_mask = jnp.ones((B, S), dtype=jnp.int32).at[1, 6:].set(0)  # some padding

    logits = xlm_roberta_linear_entity_tagger_forward(params, input_ids, attention_mask)
    logits = jax.block_until_ready(logits)
    assert logits.shape == (B, S, NUM_CLASSES)
    assert logits.dtype == jnp.float32

    # Cross-check the Pallas head against the original semantics: logits = last_hidden_state @ W.T + b
    # (no masking of the head input -- the original module never masks it; padding is handled by the
    #  loss's ignore_index).  Reference in f32 using the same bf16 hidden values the kernel sees.
    hs = jnp.take(params["embedding"], input_ids, axis=0).astype(jnp.float32)
    ref = hs @ params["l1_weight"].T + params["l1_bias"]
    assert jnp.allclose(logits, ref, atol=1e-3, rtol=1e-2), float(jnp.max(jnp.abs(logits - ref)))

    print("KERNEL_OK")
</pallas_src>

<mosaic_0001>
module attributes {stable_mosaic.version = 11 : i64} {
  func.func @_linear_head_kernel(%arg0: i32, %arg1: memref<16x768xbf16, #tpu.memory_space<vmem>>, %arg2: memref<768x128xbf16, #tpu.memory_space<vmem>>, %arg3: memref<1x128xf32, #tpu.memory_space<vmem>>, %arg4: memref<16x128xf32, #tpu.memory_space<vmem>>) attributes {dimension_semantics = [#tpu.dimension_semantics<parallel>], iteration_bounds = array<i64: 1>, scalar_prefetch = 0 : i64, scratch_operands = 0 : i64, tpu.core_type = #tpu.core_type<tc>, window_params = [{transform_indices = @transform_0, window_bounds = array<i64: 16, 768>}, {pipeline_mode = #tpu.pipeline_mode<synchronous>, transform_indices = @transform_1, window_bounds = array<i64: 768, 128>}, {pipeline_mode = #tpu.pipeline_mode<synchronous>, transform_indices = @transform_2, window_bounds = array<i64: 1, 128>}, {transform_indices = @transform_3, window_bounds = array<i64: 16, 128>}]} {
    %c0 = arith.constant 0 : index
    %c0_0 = arith.constant 0 : index
    %0 = vector.load %arg1[%c0, %c0_0] : memref<16x768xbf16, #tpu.memory_space<vmem>>, vector<16x768xbf16>
    %c0_1 = arith.constant 0 : index
    %c0_2 = arith.constant 0 : index
    %1 = vector.load %arg2[%c0_1, %c0_2] : memref<768x128xbf16, #tpu.memory_space<vmem>>, vector<768x128xbf16>
    %cst = arith.constant dense<0.000000e+00> : vector<16x128xf32>
    %2 = tpu.matmul %0, %1, %cst {dimension_numbers = #tpu.dot_dimension_numbers<[1], [0], [0], [1], [0, 0, 1, 1], [], []>} : vector<16x768xbf16>, vector<768x128xbf16>, vector<16x128xf32> -> vector<16x128xf32>
    %c0_3 = arith.constant 0 : index
    %c0_4 = arith.constant 0 : index
    %3 = vector.load %arg3[%c0_3, %c0_4] : memref<1x128xf32, #tpu.memory_space<vmem>>, vector<1x128xf32>
    %4 = vector.broadcast %3 : vector<1x128xf32> to vector<16x128xf32>
    %5 = arith.addf %2, %4 : vector<16x128xf32>
    %c0_5 = arith.constant 0 : index
    %c0_6 = arith.constant 0 : index
    %6 = vector.load %arg4[%c0_5, %c0_6] : memref<16x128xf32, #tpu.memory_space<vmem>>, vector<16x128xf32>
    tpu.vector_store %arg4[%c0_5, %c0_6], %5 {strides = array<i32>} : memref<16x128xf32, #tpu.memory_space<vmem>>, vector<16x128xf32>,
    return
  }
  func.func @transform_0(%arg0: i32) -> (i32, i32) {
    %c0_i32 = arith.constant 0 : i32
    %c0_i32_0 = arith.constant 0 : i32
    return %arg0, %c0_i32 : i32, i32
  }
  func.func @transform_1(%arg0: i32) -> (i32, i32) {
    %c0_i32 = arith.constant 0 : i32
    %c0_i32_0 = arith.constant 0 : i32
    %c0_i32_1 = arith.constant 0 : i32
    return %c0_i32, %c0_i32_0 : i32, i32
  }
  func.func @transform_2(%arg0: i32) -> (i32, i32) {
    %c0_i32 = arith.constant 0 : i32
    %c0_i32_0 = arith.constant 0 : i32
    %c0_i32_1 = arith.constant 0 : i32
    return %c0_i32, %c0_i32_0 : i32, i32
  }
  func.func @transform_3(%arg0: i32) -> (i32, i32) {
    %c0_i32 = arith.constant 0 : i32
    %c0_i32_0 = arith.constant 0 : i32
    return %arg0, %c0_i32 : i32, i32
  }
}

</mosaic_0001>

<llo_original>
// kernel: linear_entity_head.1
$region0: #{linear_entity_head.1}
  #allocation0 [shape = 'u32[]', space=smem, size = 0x4, offset = 0x4, fixed_abs, tag = 'smem constant byte address 0x4 - core index']
  #allocation1 [shape = 'u32[72,128]{1,0:T(1,128)}', space=vmem, size = 0x9000, scoped, tag = 'internal scratch']
  %s0 = inlined_call_operand.vmem [shape: bf16[16,768], index: 0, kind: input, shape index: {}]
  %s1 = inlined_call_operand.vmem [shape: bf16[768,128], index: 1, kind: input, shape index: {}]
  %s2 = inlined_call_operand.vmem [shape: f32[1,128], index: 2, kind: input, shape index: {}]
  %s3 = inlined_call_operand.hbm [shape: f32[16,128], index: 3, kind: output, shape index: {}]
  %s4 = sld [smem:[#allocation0]]
  $region22: #{linear_entity_head.1} parent=0
    _
  %s6 = ssub.s32 1, %s4
  %s7 = scalar_select 0, %s6, %s4
  $region1: #{linear_entity_head.1} parent=0
    #allocation2 [shape = 'u8[8192]{0}', space=vmem, size = 0x2000, scoped, tag = 'output window, operand 0, single buffered']
    #allocation3 [shape = 's32[1]{0}', space=sflag, size = 0x4, scoped, tag = 'scoped memory for linear_entity_head.1']
    %8 = vsyncpa [#allocation3], 0
    // Predicated region
    $region2: #{linear_entity_head.1} parent=1 // pred_check
      _
    $region3: #{linear_entity_head.1} parent=1 // pred_check_branch
      %10 = sbr.rel (0) target = $region5
    $region4: #{linear_entity_head.1} parent=1 // pred_region
      _
    $region5: #{linear_entity_head.1} parent=1 // pred_fallthru
      _
    // Predicated region
    $region6: #{linear_entity_head.1} parent=1 // pred_check
      _
    $region7: #{linear_entity_head.1} parent=1 // pred_check_branch
      %12 = sbr.rel (0) target = $region9
    $region8: #{linear_entity_head.1} parent=1 // pred_region
      _
    $region9: #{linear_entity_head.1} parent=1 // pred_fallthru
      _
    // Predicated region
    $region10: #{linear_entity_head.1} parent=1 // pred_check
      _
    $region11: #{linear_entity_head.1} parent=1 // pred_check_branch
      %14 = sbr.rel (0) target = $region13
    $region12: #{linear_entity_head.1} parent=1 // pred_region
      _
    $region13: #{linear_entity_head.1} parent=1 // pred_fallthru
      _
    %v15 = vld [vmem:[%s0] sm:$0xff]
    %v16 = vld [vmem:[%s0 + $0x8] sm:$0xff]
    %v17 = vld [vmem:[%s0 + $0x10] sm:$0xff]
    %v18 = vld [vmem:[%s0 + $0x18] sm:$0xff]
    %v19 = vld [vmem:[%s0 + $0x20] sm:$0xff]
    %v20 = vld [vmem:[%s0 + $0x28] sm:$0xff]
    %v21 = vld [vmem:[%s1] sm:$0xf]
    %v22 = vld [vmem:[%s1 + $0x4] sm:$0xf]
    %v23 = vld [vmem:[%s1 + $0x8] sm:$0xf]
    %v24 = vld [vmem:[%s1 + $0xc] sm:$0xf]
    %v25 = vld [vmem:[%s1 + $0x10] sm:$0xf]
    %v26 = vld [vmem:[%s1 + $0x14] sm:$0xf]
    %v27 = vld [vmem:[%s1 + $0x18] sm:$0xf]
    %v28 = vld [vmem:[%s1 + $0x1c] sm:$0xf]
    %v29 = vld [vmem:[%s1 + $0x20] sm:$0xf]
    %v30 = vld [vmem:[%s1 + $0x24] sm:$0xf]
    %v31 = vld [vmem:[%s1 + $0x28] sm:$0xf]
    %v32 = vld [vmem:[%s1 + $0x2c] sm:$0xf]
    %v33 = vld [vmem:[%s1 + $0x30] sm:$0xf]
    %v34 = vld [vmem:[%s1 + $0x34] sm:$0xf]
    %v35 = vld [vmem:[%s1 + $0x38] sm:$0xf]
    %v36 = vld [vmem:[%s1 + $0x3c] sm:$0xf]
    %v37 = vld [vmem:[%s1 + $0x40] sm:$0xf]
    %v38 = vld [vmem:[%s1 + $0x44] sm:$0xf]
    %v39 = vld [vmem:[%s1 + $0x48] sm:$0xf]
    %v40 = vld [vmem:[%s1 + $0x4c] sm:$0xf]
    %v41 = vld [vmem:[%s1 + $0x50] sm:$0xf]
    %v42 = vld [vmem:[%s1 + $0x54] sm:$0xf]
    %v43 = vld [vmem:[%s1 + $0x58] sm:$0xf]
    %v44 = vld [vmem:[%s1 + $0x5c] sm:$0xf]
    %v45 = vld [vmem:[%s1 + $0x60] sm:$0xf]
    %v46 = vld [vmem:[%s1 + $0x64] sm:$0xf]
    %v47 = vld [vmem:[%s1 + $0x68] sm:$0xf]
    %v48 = vld [vmem:[%s1 + $0x6c] sm:$0xf]
    %v49 = vld [vmem:[%s1 + $0x70] sm:$0xf]
    %v50 = vld [vmem:[%s1 + $0x74] sm:$0xf]
    %v51 = vld [vmem:[%s1 + $0x78] sm:$0xf]
    %v52 = vld [vmem:[%s1 + $0x7c] sm:$0xf]
    %v53 = vld [vmem:[%s1 + $0x80] sm:$0xf]
    %v54 = vld [vmem:[%s1 + $0x84] sm:$0xf]
    %v55 = vld [vmem:[%s1 + $0x88] sm:$0xf]
    %v56 = vld [vmem:[%s1 + $0x8c] sm:$0xf]
    %v57 = vld [vmem:[%s1 + $0x90] sm:$0xf]
    %v58 = vld [vmem:[%s1 + $0x94] sm:$0xf]
    %v59 = vld [vmem:[%s1 + $0x98] sm:$0xf]
    %v60 = vld [vmem:[%s1 + $0x9c] sm:$0xf]
    %v61 = vld [vmem:[%s1 + $0xa0] sm:$0xf]
    %v62 = vld [vmem:[%s1 + $0xa4] sm:$0xf]
    %v63 = vld [vmem:[%s1 + $0xa8] sm:$0xf]
    %v64 = vld [vmem:[%s1 + $0xac] sm:$0xf]
    %v65 = vld [vmem:[%s1 + $0xb0] sm:$0xf]
    %v66 = vld [vmem:[%s1 + $0xb4] sm:$0xf]
    %v67 = vld [vmem:[%s1 + $0xb8] sm:$0xf]
    %v68 = vld [vmem:[%s1 + $0xbc] sm:$0xf]
    %v69 = vld [vmem:[%s1 + $0xc0] sm:$0xf]
    %v70 = vld [vmem:[%s1 + $0xc4] sm:$0xf]
    %v71 = vld [vmem:[%s1 + $0xc8] sm:$0xf]
    %v72 = vld [vmem:[%s1 + $0xcc] sm:$0xf]
    %v73 = vld [vmem:[%s1 + $0xd0] sm:$0xf]
    %v74 = vld [vmem:[%s1 + $0xd4] sm:$0xf]
    %v75 = vld [vmem:[%s1 + $0xd8] sm:$0xf]
    %v76 = vld [vmem:[%s1 + $0xdc] sm:$0xf]
    %v77 = vld [vmem:[%s1 + $0xe0] sm:$0xf]
    %v78 = vld [vmem:[%s1 + $0xe4] sm:$0xf]
    %v79 = vld [vmem:[%s1 + $0xe8] sm:$0xf]
    %v80 = vld [vmem:[%s1 + $0xec] sm:$0xf]
    %v81 = vld [vmem:[%s1 + $0xf0] sm:$0xf]
    %v82 = vld [vmem:[%s1 + $0xf4] sm:$0xf]
    %v83 = vld [vmem:[%s1 + $0xf8] sm:$0xf]
    %v84 = vld [vmem:[%s1 + $0xfc] sm:$0xf]
    %v85 = vld [vmem:[%s1 + $0x100] sm:$0xf]
    %v86 = vld [vmem:[%s1 + $0x104] sm:$0xf]
    %v87 = vld [vmem:[%s1 + $0x108] sm:$0xf]
    %v88 = vld [vmem:[%s1 + $0x10c] sm:$0xf]
    %v89 = vld [vmem:[%s1 + $0x110] sm:$0xf]
    %v90 = vld [vmem:[%s1 + $0x114] sm:$0xf]
    %v91 = vld [vmem:[%s1 + $0x118] sm:$0xf]
    %v92 = vld [vmem:[%s1 + $0x11c] sm:$0xf]
    %v93 = vld [vmem:[%s1 + $0x120] sm:$0xf]
    %v94 = vld [vmem:[%s1 + $0x124] sm:$0xf]
    %v95 = vld [vmem:[%s1 + $0x128] sm:$0xf]
    %v96 = vld [vmem:[%s1 + $0x12c] sm:$0xf]
    %v97 = vld [vmem:[%s1 + $0x130] sm:$0xf]
    %v98 = vld [vmem:[%s1 + $0x134] sm:$0xf]
    %v99 = vld [vmem:[%s1 + $0x138] sm:$0xf]
    %v100 = vld [vmem:[%s1 + $0x13c] sm:$0xf]
    %v101 = vld [vmem:[%s1 + $0x140] sm:$0xf]
    %v102 = vld [vmem:[%s1 + $0x144] sm:$0xf]
    %v103 = vld [vmem:[%s1 + $0x148] sm:$0xf]
    %v104 = vld [vmem:[%s1 + $0x14c] sm:$0xf]
    %v105 = vld [vmem:[%s1 + $0x150] sm:$0xf]
    %v106 = vld [vmem:[%s1 + $0x154] sm:$0xf]
    %v107 = vld [vmem:[%s1 + $0x158] sm:$0xf]
    %v108 = vld [vmem:[%s1 + $0x15c] sm:$0xf]
    %v109 = vld [vmem:[%s1 + $0x160] sm:$0xf]
    %v110 = vld [vmem:[%s1 + $0x164] sm:$0xf]
    %v111 = vld [vmem:[%s1 + $0x168] sm:$0xf]
    %v112 = vld [vmem:[%s1 + $0x16c] sm:$0xf]
    %v113 = vld [vmem:[%s1 + $0x170] sm:$0xf]
    %v114 = vld [vmem:[%s1 + $0x174] sm:$0xf]
    %v115 = vld [vmem:[%s1 + $0x178] sm:$0xf]
    %v116 = vld [vmem:[%s1 + $0x17c] sm:$0xf]
    %v117 = vld [vmem:[%s2] sm:$0x1]
    %v119 = vperm.slane %v117, 0
    %v127 = vunpack.c.l.b16 %v15
    %v128 = vunpack.c.h.b16 %v15
    %v129 = vunpack.c.l.b16 %v16
    %v130 = vunpack.c.h.b16 %v16
    %v131 = vunpack.c.l.b16 %v17
    %v132 = vunpack.c.h.b16 %v17
    %v133 = vunpack.c.l.b16 %v18
    %v134 = vunpack.c.h.b16 %v18
    %v135 = vunpack.c.l.b16 %v19
    %v136 = vunpack.c.h.b16 %v19
    %v137 = vunpack.c.l.b16 %v20
    %v138 = vunpack.c.h.b16 %v20
    %v139 = vpack.c.b16 %v133, %v127
    %v140 = vpack.c.b16 %v134, %v128
    %v141 = vpack.c.b16 %v135, %v129
    %v142 = vpack.c.b16 %v136, %v130
    %v143 = vpack.c.b16 %v137, %v131
    %v144 = vpack.c.b16 %v138, %v132
    %v247 = vunpack.c.l.b16 %v21
    %v248 = vunpack.c.l.b16 %v22
    %v249 = vunpack.c.l.b16 %v23
    %v250 = vunpack.c.l.b16 %v24
    %v251 = vunpack.c.l.b16 %v25
    %v252 = vunpack.c.l.b16 %v26
    %v253 = vunpack.c.l.b16 %v27
    %v254 = vunpack.c.l.b16 %v28
    %v255 = vunpack.c.l.b16 %v29
    %v256 = vunpack.c.l.b16 %v30
    %v257 = vunpack.c.l.b16 %v31
    %v258 = vunpack.c.l.b16 %v32
    %v259 = vunpack.c.l.b16 %v33
    %v260 = vunpack.c.l.b16 %v34
    %v261 = vunpack.c.l.b16 %v35
    %v262 = vunpack.c.l.b16 %v36
    %v263 = vunpack.c.l.b16 %v37
    %v264 = vunpack.c.l.b16 %v38
    %v265 = vunpack.c.l.b16 %v39
    %v266 = vunpack.c.l.b16 %v40
    %v267 = vunpack.c.l.b16 %v41
    %v268 = vunpack.c.l.b16 %v42
    %v269 = vunpack.c.l.b16 %v43
    %v270 = vunpack.c.l.b16 %v44
    %v271 = vunpack.c.l.b16 %v45
    %v272 = vunpack.c.l.b16 %v46
    %v273 = vunpack.c.l.b16 %v47
    %v274 = vunpack.c.l.b16 %v48
    %v275 = vunpack.c.l.b16 %v49
    %v276 = vunpack.c.l.b16 %v50
    %v277 = vunpack.c.l.b16 %v51
    %v278 = vunpack.c.l.b16 %v52
    %v279 = vunpack.c.l.b16 %v53
    %v280 = vunpack.c.l.b16 %v54
    %v281 = vunpack.c.l.b16 %v55
    %v282 = vunpack.c.l.b16 %v56
    %v283 = vunpack.c.l.b16 %v57
    %v284 = vunpack.c.l.b16 %v58
    %v285 = vunpack.c.l.b16 %v59
    %v286 = vunpack.c.l.b16 %v60
    %v287 = vunpack.c.l.b16 %v61
    %v288 = vunpack.c.l.b16 %v62
    %v289 = vunpack.c.l.b16 %v63
    %v290 = vunpack.c.l.b16 %v64
    %v291 = vunpack.c.l.b16 %v65
    %v292 = vunpack.c.l.b16 %v66
    %v293 = vunpack.c.l.b16 %v67
    %v294 = vunpack.c.l.b16 %v68
    %v295 = vunpack.c.l.b16 %v69
    %v296 = vunpack.c.l.b16 %v70
    %v297 = vunpack.c.l.b16 %v71
    %v298 = vunpack.c.l.b16 %v72
    %v299 = vunpack.c.l.b16 %v73
    %v300 = vunpack.c.l.b16 %v74
    %v301 = vunpack.c.l.b16 %v75
    %v302 = vunpack.c.l.b16 %v76
    %v303 = vunpack.c.l.b16 %v77
    %v304 = vunpack.c.l.b16 %v78
    %v305 = vunpack.c.l.b16 %v79
    %v306 = vunpack.c.l.b16 %v80
    %v307 = vunpack.c.l.b16 %v81
    %v308 = vunpack.c.l.b16 %v82
    %v309 = vunpack.c.l.b16 %v83
    %v310 = vunpack.c.l.b16 %v84
    %v311 = vunpack.c.l.b16 %v85
    %v312 = vunpack.c.l.b16 %v86
    %v313 = vunpack.c.l.b16 %v87
    %v314 = vunpack.c.l.b16 %v88
    %v315 = vunpack.c.l.b16 %v89
    %v316 = vunpack.c.l.b16 %v90
    %v317 = vunpack.c.l.b16 %v91
    %v318 = vunpack.c.l.b16 %v92
    %v319 = vunpack.c.l.b16 %v93
    %v320 = vunpack.c.l.b16 %v94
    %v321 = vunpack.c.l.b16 %v95
    %v322 = vunpack.c.l.b16 %v96
    %v323 = vunpack.c.l.b16 %v97
    %v324 = vunpack.c.l.b16 %v98
    %v325 = vunpack.c.l.b16 %v99
    %v326 = vunpack.c.l.b16 %v100
    %v327 = vunpack.c.l.b16 %v101
    %v328 = vunpack.c.l.b16 %v102
    %v329 = vunpack.c.l.b16 %v103
    %v330 = vunpack.c.l.b16 %v104
    %v331 = vunpack.c.l.b16 %v105
    %v332 = vunpack.c.l.b16 %v106
    %v333 = vunpack.c.l.b16 %v107
    %v334 = vunpack.c.l.b16 %v108
    %v335 = vunpack.c.l.b16 %v109
    %v336 = vunpack.c.l.b16 %v110
    %v337 = vunpack.c.l.b16 %v111
    %v338 = vunpack.c.l.b16 %v112
    %v339 = vunpack.c.l.b16 %v113
    %v340 = vunpack.c.l.b16 %v114
    %v341 = vunpack.c.l.b16 %v115
    %v342 = vunpack.c.l.b16 %v116
    %v343 = vpack.c.b16 %v248, %v247
    %v344 = vpack.c.b16 %v250, %v249
    %v345 = vpack.c.b16 %v252, %v251
    %v346 = vpack.c.b16 %v254, %v253
    %v347 = vpack.c.b16 %v256, %v255
    %v348 = vpack.c.b16 %v258, %v257
    %v349 = vpack.c.b16 %v260, %v259
    %v350 = vpack.c.b16 %v262, %v261
    %v351 = vpack.c.b16 %v264, %v263
    %v352 = vpack.c.b16 %v266, %v265
    %v353 = vpack.c.b16 %v268, %v267
    %v354 = vpack.c.b16 %v270, %v269
    %v355 = vpack.c.b16 %v272, %v271
    %v356 = vpack.c.b16 %v274, %v273
    %v357 = vpack.c.b16 %v276, %v275
    %v358 = vpack.c.b16 %v278, %v277
    %v359 = vpack.c.b16 %v280, %v279
    %v360 = vpack.c.b16 %v282, %v281
    %v361 = vpack.c.b16 %v284, %v283
    %v362 = vpack.c.b16 %v286, %v285
    %v363 = vpack.c.b16 %v288, %v287
    %v364 = vpack.c.b16 %v290, %v289
    %v365 = vpack.c.b16 %v292, %v291
    %v366 = vpack.c.b16 %v294, %v293
    %v367 = vpack.c.b16 %v296, %v295
    %v368 = vpack.c.b16 %v298, %v297
    %v369 = vpack.c.b16 %v300, %v299
    %v370 = vpack.c.b16 %v302, %v301
    %v371 = vpack.c.b16 %v304, %v303
    %v372 = vpack.c.b16 %v306, %v305
    %v373 = vpack.c.b16 %v308, %v307
    %v374 = vpack.c.b16 %v310, %v309
    %v375 = vpack.c.b16 %v312, %v311
    %v376 = vpack.c.b16 %v314, %v313
    %v377 = vpack.c.b16 %v316, %v315
    %v378 = vpack.c.b16 %v318, %v317
    %v379 = vpack.c.b16 %v320, %v319
    %v380 = vpack.c.b16 %v322, %v321
    %v381 = vpack.c.b16 %v324, %v323
    %v382 = vpack.c.b16 %v326, %v325
    %v383 = vpack.c.b16 %v328, %v327
    %v384 = vpack.c.b16 %v330, %v329
    %v385 = vpack.c.b16 %v332, %v331
    %v386 = vpack.c.b16 %v334, %v333
    %v387 = vpack.c.b16 %v336, %v335
    %v388 = vpack.c.b16 %v338, %v337
    %v389 = vpack.c.b16 %v340, %v339
    %v390 = vpack.c.b16 %v342, %v341
    %439 = vmatpush.bf16.msra.mxu0 %v350
    %440 = vmatpush.bf16.msra.mxu0 %v349
    %441 = vmatpush.bf16.msra.mxu0 %v348
    %442 = vmatpush.bf16.msra.mxu0 %v347
    %443 = vmatpush.bf16.msra.mxu0 %v346
    %444 = vmatpush.bf16.msra.mxu0 %v345
    %445 = vmatpush.bf16.msra.mxu0 %v344
    %446 = vmatpush.bf16.msra.mxu0 %v343
    %447 = vmatmul.bf16.gmra.mxu0 %v139
    %v448 = vpop.f32.mrf.mxu0
    %v449 = vadd.f32 %v119, %v448
    %v450 = vpop.f32.mrf.mxu0
    %v451 = vadd.f32 %v119, %v450
    %452 = vdwg.mxu0
    %453 = vmatpush.bf16.msra.mxu0 %v358
    %454 = vmatpush.bf16.msra.mxu0 %v357
    %455 = vmatpush.bf16.msra.mxu0 %v356
    %456 = vmatpush.bf16.msra.mxu0 %v355
    %457 = vmatpush.bf16.msra.mxu0 %v354
    %458 = vmatpush.bf16.msra.mxu0 %v353
    %459 = vmatpush.bf16.msra.mxu0 %v352
    %460 = vmatpush.bf16.msra.mxu0 %v351
    %461 = vmatmul.bf16.gmra.mxu0 %v140
    %v462 = vpop.f32.mrf.mxu0
    %v463 = vadd.f32 %v449, %v462
    %v464 = vpop.f32.mrf.mxu0
    %v465 = vadd.f32 %v451, %v464
    %466 = vdwg.mxu0
    %467 = vmatpush.bf16.msra.mxu0 %v366
    %468 = vmatpush.bf16.msra.mxu0 %v365
    %469 = vmatpush.bf16.msra.mxu0 %v364
    %470 = vmatpush.bf16.msra.mxu0 %v363
    %471 = vmatpush.bf16.msra.mxu0 %v362
    %472 = vmatpush.bf16.msra.mxu0 %v361
    %473 = vmatpush.bf16.msra.mxu0 %v360
    %474 = vmatpush.bf16.msra.mxu0 %v359
    %475 = vmatmul.bf16.gmra.mxu0 %v141
    %v476 = vpop.f32.mrf.mxu0
    %v477 = vadd.f32 %v463, %v476
    %v478 = vpop.f32.mrf.mxu0
    %v479 = vadd.f32 %v465, %v478
    %480 = vdwg.mxu0
    %481 = vmatpush.bf16.msra.mxu0 %v374
    %482 = vmatpush.bf16.msra.mxu0 %v373
    %483 = vmatpush.bf16.msra.mxu0 %v372
    %484 = vmatpush.bf16.msra.mxu0 %v371
    %485 = vmatpush.bf16.msra.mxu0 %v370
    %486 = vmatpush.bf16.msra.mxu0 %v369
    %487 = vmatpush.bf16.msra.mxu0 %v368
    %488 = vmatpush.bf16.msra.mxu0 %v367
    %489 = vmatmul.bf16.gmra.mxu0 %v142
    %v490 = vpop.f32.mrf.mxu0
    %v491 = vadd.f32 %v477, %v490
    %v492 = vpop.f32.mrf.mxu0
    %v493 = vadd.f32 %v479, %v492
    %494 = vdwg.mxu0
    %495 = vmatpush.bf16.msra.mxu0 %v382
    %496 = vmatpush.bf16.msra.mxu0 %v381
    %497 = vmatpush.bf16.msra.mxu0 %v380
    %498 = vmatpush.bf16.msra.mxu0 %v379
    %499 = vmatpush.bf16.msra.mxu0 %v378
    %500 = vmatpush.bf16.msra.mxu0 %v377
    %501 = vmatpush.bf16.msra.mxu0 %v376
    %502 = vmatpush.bf16.msra.mxu0 %v375
    %503 = vmatmul.bf16.gmra.mxu0 %v143
    %v504 = vpop.f32.mrf.mxu0
    %v505 = vadd.f32 %v491, %v504
    %v506 = vpop.f32.mrf.mxu0
    %v507 = vadd.f32 %v493, %v506
    %508 = vdwg.mxu0
    %509 = vmatpush.bf16.msra.mxu0 %v390
    %510 = vmatpush.bf16.msra.mxu0 %v389
    %511 = vmatpush.bf16.msra.mxu0 %v388
    %512 = vmatpush.bf16.msra.mxu0 %v387
    %513 = vmatpush.bf16.msra.mxu0 %v386
    %514 = vmatpush.bf16.msra.mxu0 %v385
    %515 = vmatpush.bf16.msra.mxu0 %v384
    %516 = vmatpush.bf16.msra.mxu0 %v383
    %517 = vmatmul.bf16.gmra.mxu0 %v144
    %v518 = vpop.f32.mrf.mxu0
    %v519 = vadd.f32 %v505, %v518
    %v520 = vpop.f32.mrf.mxu0
    %v521 = vadd.f32 %v507, %v520
    %522 = vdwg.mxu0
    %523 = vst [vmem:[#allocation2] sm:$0xff] %v519
    %524 = vst [vmem:[#allocation2 + $0x8] sm:$0xff] %v521
    // Predicated region
    $region14: #{linear_entity_head.1} parent=1 // pred_check
      _
    $region15: #{linear_entity_head.1} parent=1 // pred_check_branch
      %526 = sbr.rel (0) target = $region17
    $region16: #{linear_entity_head.1} parent=1 // pred_region
      %528 = vsyncadd [#allocation3], 0
      %s529 = sshll.u32 [#allocation2], 4
      %s530 = int_to_ptr.vmem [resolvable:$true] %s529
      %s531 = sshll.u32 %s3, 4
      %s532 = int_to_ptr.hbm [resolvable:$true] %s531
      %537 = dma.vmem_to_hbm [thread:$0]  %s530, 256, %s532, [#allocation3], 128, 128, 8
    $region17: #{linear_entity_head.1} parent=1 // pred_fallthru
      _
    // Predicated region
    $region18: #{linear_entity_head.1} parent=1 // pred_check
      _
    $region19: #{linear_entity_head.1} parent=1 // pred_check_branch
      %539 = sbr.rel (0) target = $region21
    $region20: #{linear_entity_head.1} parent=1 // pred_region
      %541 = dma.done [#allocation3], 256
    $region21: #{linear_entity_head.1} parent=1 // pred_fallthru
      _
    %542 = vsyncpa [#allocation3], 1

</llo_original>
